<compile_context>
chip_gen: v6e
topology: v6e:2x2x1
jax: 0.10.0
libtpu: 0.0.40
codegen_flags: <defaults>
</compile_context>

<pallas_src>
import jax
import jax.numpy as jnp
from jax.experimental import pallas as pl
from jax.experimental.pallas import tpu as pltpu


def _round_up(n, m):
    return ((n + m - 1) // m) * m


def _cdiv(a, b):
    return -(-a // b)


def _critic_kernel(x_ref,
                   w1_ref, b1_ref,
                   w2_ref, b2_ref,
                   w3_ref, b3_ref,
                   w4_ref, b4_ref,
                   o_ref):
    mm = w1_ref.dtype  # matmul dtype (f32, or bf16 in perf mode); accumulation is f32

    # Layer 1: K -> 128, ReLU (MXU). x arrives already in mm dtype (wrapper cast).
    h = jnp.dot(x_ref[...], w1_ref[...], preferred_element_type=jnp.float32)
    h = jnp.maximum(h + b1_ref[...], 0.0)

    # Layer 2: 128 -> 256, ReLU (MXU)
    h = jnp.dot(h.astype(mm), w2_ref[...], preferred_element_type=jnp.float32)
    h = jnp.maximum(h + b2_ref[...], 0.0)

    # Layer 3: 256 -> 128, ReLU (MXU)
    h = jnp.dot(h.astype(mm), w3_ref[...], preferred_element_type=jnp.float32)
    h = jnp.maximum(h + b3_ref[...], 0.0)

    # Layer 4: 128 -> 1. VPU broadcast-multiply + XLU lane reduction, then store
    # the result as a lane-dense [1, TB] row (unmasked stores) rather than a
    # lane-sparse [TB, 1] column.
    col = jnp.sum(h * w4_ref[...], axis=-1, keepdims=True) + b4_ref[...]   # [TB, 1]
    row = jnp.transpose(col)                                               # [1, TB]
    o_ref[...] = row.reshape(1, 1, -1).astype(o_ref.dtype)


def critic_forward(x, params, *, block_b=1024, use_bf16=False, min_tiles=2):
    """Critic forward: x [B, K] float32 -> value [B, 1] float32.

    params: dict l1..l4 of (W, b), W stored as [in_features, out_features]
    (transposed vs. PyTorch) so each layer is h = relu(h @ W + b).

    use_bf16: bf16 x/weights on the three MXU matmuls (f32 accumulation, f32
    bias/ReLU epilogue) -> ~2x less x DMA and fewer MXU passes on all of
    v5e/v6e/v7x, at ~1e-2 relative error. Mode, not default.
    """
    B, K = x.shape
    w1, b1 = params["l1"]
    w2, b2 = params["l2"]
    w3, b3 = params["l3"]
    w4, b4 = params["l4"]

    mm_dtype = jnp.bfloat16 if use_bf16 else jnp.float32
    sub = 16 if use_bf16 else 8   # min sublane tile: (16,128) bf16, (8,128) f32

    # Balanced batch tiles: cap at block_b, and use >= min_tiles grid steps when
    # B is large enough to split, so v7x's two TensorCores both get work.
    n_tiles = max(_cdiv(B, block_b), min_tiles if B >= min_tiles * sub else 1)
    TB = _round_up(_cdiv(B, n_tiles), sub)
    n_tiles = _cdiv(B, TB)
    Bp = n_tiles * TB

    # No K padding (K equals the full array dim; Mosaic pads the contraction
    # internally). Only the batch tail is padded; bf16 cast is folded into the
    # same copy. Padded rows produce finite junk and are sliced off below.
    x_p = x
    if Bp != B:
        x_p = jnp.pad(x, ((0, Bp - B), (0, 0)))
    x_p = x_p.astype(mm_dtype)

    w1_c = w1.astype(mm_dtype)
    w2_c = w2.astype(mm_dtype)
    w3_c = w3.astype(mm_dtype)
    w4_row = w4.reshape(1, -1).astype(jnp.float32)  # [1, 128]; VPU epilogue stays f32

    const = lambda i: (0, 0)  # weights/biases: same block every step -> VMEM-resident
    out_p = pl.pallas_call(
        _critic_kernel,
        out_shape=jax.ShapeDtypeStruct((n_tiles, 1, TB), jnp.float32),
        grid=(n_tiles,),
        in_specs=[
            pl.BlockSpec((TB, K), lambda i: (i, 0)),   # x tile (only streamed input)
            pl.BlockSpec(w1_c.shape, const),           # W1  [K, 128]
            pl.BlockSpec(b1.shape, const),             # b1  [1, 128]
            pl.BlockSpec(w2_c.shape, const),           # W2  [128, 256]
            pl.BlockSpec(b2.shape, const),             # b2  [1, 256]
            pl.BlockSpec(w3_c.shape, const),           # W3  [256, 128]
            pl.BlockSpec(b3.shape, const),             # b3  [1, 128]
            pl.BlockSpec(w4_row.shape, const),         # W4' [1, 128]
            pl.BlockSpec(b4.shape, const),             # b4  [1, 1]
        ],
        out_specs=pl.BlockSpec((1, 1, TB), lambda i: (i, 0, 0)),  # lane-dense rows
        compiler_params=pltpu.CompilerParams(
            dimension_semantics=("parallel",)),        # batch splits over v7x's 2 TCs
    )(x_p, w1_c, b1, w2_c, b2, w3_c, b3, w4_row, b4)

    # (n_tiles, 1, TB) -> (Bp,) -> drop padded tail -> (B, 1)
    return out_p.reshape(Bp)[:B].reshape(B, 1)


def init_critic_params(key, input_size):
    """Matches the PyTorch Critic: kaiming_normal_(nonlinearity='relu') weights
    (std = sqrt(2 / fan_in)), PyTorch-default uniform(-1/sqrt(fan_in), 1/sqrt(fan_in))
    biases. Weights stored as [in, out] (transposed vs. PyTorch)."""
    sizes = [(input_size, 128), (128, 256), (256, 128), (128, 1)]
    params = {}
    keys = jax.random.split(key, 2 * len(sizes))
    for i, (fan_in, fan_out) in enumerate(sizes):
        wk, bk = keys[2 * i], keys[2 * i + 1]
        std = (2.0 / fan_in) ** 0.5
        W = std * jax.random.normal(wk, (fan_in, fan_out), dtype=jnp.float32)
        bound = 1.0 / (fan_in ** 0.5)
        b = jax.random.uniform(bk, (1, fan_out), dtype=jnp.float32,
                               minval=-bound, maxval=bound)
        params[f"l{i + 1}"] = (W, b)
    return params


def _reference_forward(x, params):
    h = x
    for name in ["l1", "l2", "l3"]:
        W, b = params[name]
        h = jnp.maximum(h @ W + b, 0.0)
    W, b = params["l4"]
    return h @ W + b


if __name__ == "__main__":
    key = jax.random.PRNGKey(0)
    pkey, xkey = jax.random.split(key)

    batch = 8
    input_size = 32  # Critic(input_size)

    params = init_critic_params(pkey, input_size)
    x = jax.random.normal(xkey, (batch, input_size), dtype=jnp.float32)
    ref = _reference_forward(x, params)

    # f32 path (default)
    out = jax.block_until_ready(critic_forward(x, params))
    assert out.shape == (batch, 1), out.shape
    assert jnp.allclose(out, ref, atol=1e-4, rtol=1e-4), "f32 mismatch vs reference"

    # bf16 MXU path (f32 accumulation) -> loose tolerance.
    out_bf16 = jax.block_until_ready(critic_forward(x, params, use_bf16=True))
    assert out_bf16.shape == (batch, 1), out_bf16.shape
    assert jnp.allclose(out_bf16, ref, atol=1e-1, rtol=1e-1), "bf16 mismatch vs reference"

    # Multi-tile grid + batch-tail padding (B=37, block_b=16 -> 3 tiles of 16).
    x2 = jax.random.normal(jax.random.PRNGKey(1), (37, input_size), dtype=jnp.float32)
    ref2 = _reference_forward(x2, params)
    out2 = jax.block_until_ready(critic_forward(x2, params, block_b=16))
    assert out2.shape == (37, 1), out2.shape
    assert jnp.allclose(out2, ref2, atol=1e-4, rtol=1e-4), "tiled mismatch vs reference"

    # bf16 multi-tile (B=100, block_b=32 -> 4 tiles of 32; 16-sublane aligned).
    x3 = jax.random.normal(jax.random.PRNGKey(2), (100, input_size), dtype=jnp.float32)
    ref3 = _reference_forward(x3, params)
    out3 = jax.block_until_ready(critic_forward(x3, params, block_b=32, use_bf16=True))
    assert out3.shape == (100, 1), out3.shape
    assert jnp.allclose(out3, ref3, atol=1e-1, rtol=1e-1), "bf16 tiled mismatch vs reference"

    print("KERNEL_OK")
</pallas_src>

<mosaic_0001>
module attributes {stable_mosaic.version = 11 : i64} {
  func.func @_critic_kernel(%arg0: i32, %arg1: memref<8x32xf32, #tpu.memory_space<vmem>>, %arg2: memref<32x128xf32, #tpu.memory_space<vmem>>, %arg3: memref<1x128xf32, #tpu.memory_space<vmem>>, %arg4: memref<128x256xf32, #tpu.memory_space<vmem>>, %arg5: memref<1x256xf32, #tpu.memory_space<vmem>>, %arg6: memref<256x128xf32, #tpu.memory_space<vmem>>, %arg7: memref<1x128xf32, #tpu.memory_space<vmem>>, %arg8: memref<1x128xf32, #tpu.memory_space<vmem>>, %arg9: memref<1x1xf32, #tpu.memory_space<vmem>>, %arg10: memref<1x1x8xf32, #tpu.memory_space<vmem>>) attributes {dimension_semantics = [#tpu.dimension_semantics<parallel>], iteration_bounds = array<i64: 1>, scalar_prefetch = 0 : i64, scratch_operands = 0 : i64, tpu.core_type = #tpu.core_type<tc>, window_params = [{transform_indices = @transform_0, window_bounds = array<i64: 8, 32>}, {pipeline_mode = #tpu.pipeline_mode<synchronous>, transform_indices = @transform_1, window_bounds = array<i64: 32, 128>}, {pipeline_mode = #tpu.pipeline_mode<synchronous>, transform_indices = @transform_2, window_bounds = array<i64: 1, 128>}, {pipeline_mode = #tpu.pipeline_mode<synchronous>, transform_indices = @transform_3, window_bounds = array<i64: 128, 256>}, {pipeline_mode = #tpu.pipeline_mode<synchronous>, transform_indices = @transform_4, window_bounds = array<i64: 1, 256>}, {pipeline_mode = #tpu.pipeline_mode<synchronous>, transform_indices = @transform_5, window_bounds = array<i64: 256, 128>}, {pipeline_mode = #tpu.pipeline_mode<synchronous>, transform_indices = @transform_6, window_bounds = array<i64: 1, 128>}, {pipeline_mode = #tpu.pipeline_mode<synchronous>, transform_indices = @transform_7, window_bounds = array<i64: 1, 128>}, {pipeline_mode = #tpu.pipeline_mode<synchronous>, transform_indices = @transform_8, window_bounds = array<i64: 1, 1>}, {transform_indices = @transform_9, window_bounds = array<i64: 1, 1, 8>}]} {
    %c0 = arith.constant 0 : index
    %c0_0 = arith.constant 0 : index
    %0 = vector.load %arg1[%c0, %c0_0] : memref<8x32xf32, #tpu.memory_space<vmem>>, vector<8x32xf32>
    %c0_1 = arith.constant 0 : index
    %c0_2 = arith.constant 0 : index
    %1 = vector.load %arg2[%c0_1, %c0_2] : memref<32x128xf32, #tpu.memory_space<vmem>>, vector<32x128xf32>
    %cst = arith.constant dense<0.000000e+00> : vector<8x128xf32>
    %2 = tpu.matmul %0, %1, %cst {dimension_numbers = #tpu.dot_dimension_numbers<[1], [0], [0], [1], [0, 0, 1, 1], [], []>} : vector<8x32xf32>, vector<32x128xf32>, vector<8x128xf32> -> vector<8x128xf32>
    %c0_3 = arith.constant 0 : index
    %c0_4 = arith.constant 0 : index
    %3 = vector.load %arg3[%c0_3, %c0_4] : memref<1x128xf32, #tpu.memory_space<vmem>>, vector<1x128xf32>
    %4 = vector.broadcast %3 : vector<1x128xf32> to vector<8x128xf32>
    %5 = arith.addf %2, %4 : vector<8x128xf32>
    %cst_5 = arith.constant 0.000000e+00 : f32
    %6 = vector.broadcast %cst_5 : f32 to vector<8x128xf32>
    %7 = arith.maximumf %5, %6 : vector<8x128xf32>
    %c0_6 = arith.constant 0 : index
    %c0_7 = arith.constant 0 : index
    %8 = vector.load %arg4[%c0_6, %c0_7] : memref<128x256xf32, #tpu.memory_space<vmem>>, vector<128x256xf32>
    %cst_8 = arith.constant dense<0.000000e+00> : vector<8x256xf32>
    %9 = tpu.matmul %7, %8, %cst_8 {dimension_numbers = #tpu.dot_dimension_numbers<[1], [0], [0], [1], [0, 0, 1, 1], [], []>} : vector<8x128xf32>, vector<128x256xf32>, vector<8x256xf32> -> vector<8x256xf32>
    %c0_9 = arith.constant 0 : index
    %c0_10 = arith.constant 0 : index
    %10 = vector.load %arg5[%c0_9, %c0_10] : memref<1x256xf32, #tpu.memory_space<vmem>>, vector<1x256xf32>
    %11 = vector.broadcast %10 : vector<1x256xf32> to vector<8x256xf32>
    %12 = arith.addf %9, %11 : vector<8x256xf32>
    %cst_11 = arith.constant 0.000000e+00 : f32
    %13 = vector.broadcast %cst_11 : f32 to vector<8x256xf32>
    %14 = arith.maximumf %12, %13 : vector<8x256xf32>
    %c0_12 = arith.constant 0 : index
    %c0_13 = arith.constant 0 : index
    %15 = vector.load %arg6[%c0_12, %c0_13] : memref<256x128xf32, #tpu.memory_space<vmem>>, vector<256x128xf32>
    %cst_14 = arith.constant dense<0.000000e+00> : vector<8x128xf32>
    %16 = tpu.matmul %14, %15, %cst_14 {dimension_numbers = #tpu.dot_dimension_numbers<[1], [0], [0], [1], [0, 0, 1, 1], [], []>} : vector<8x256xf32>, vector<256x128xf32>, vector<8x128xf32> -> vector<8x128xf32>
    %c0_15 = arith.constant 0 : index
    %c0_16 = arith.constant 0 : index
    %17 = vector.load %arg7[%c0_15, %c0_16] : memref<1x128xf32, #tpu.memory_space<vmem>>, vector<1x128xf32>
    %18 = vector.broadcast %17 : vector<1x128xf32> to vector<8x128xf32>
    %19 = arith.addf %16, %18 : vector<8x128xf32>
    %cst_17 = arith.constant 0.000000e+00 : f32
    %20 = vector.broadcast %cst_17 : f32 to vector<8x128xf32>
    %21 = arith.maximumf %19, %20 : vector<8x128xf32>
    %c0_18 = arith.constant 0 : index
    %c0_19 = arith.constant 0 : index
    %22 = vector.load %arg8[%c0_18, %c0_19] : memref<1x128xf32, #tpu.memory_space<vmem>>, vector<1x128xf32>
    %23 = vector.broadcast %22 : vector<1x128xf32> to vector<8x128xf32>
    %24 = arith.mulf %21, %23 : vector<8x128xf32>
    %cst_20 = arith.constant dense<0.000000e+00> : vector<8xf32>
    %25 = vector.multi_reduction <add>, %24, %cst_20 [1] : vector<8x128xf32> to vector<8xf32>
    %26 = vector.shape_cast %25 : vector<8xf32> to vector<8x1xf32>
    %c0_21 = arith.constant 0 : index
    %c0_22 = arith.constant 0 : index
    %27 = vector.load %arg9[%c0_21, %c0_22] : memref<1x1xf32, #tpu.memory_space<vmem>>, vector<1x1xf32>
    %28 = vector.broadcast %27 : vector<1x1xf32> to vector<8x1xf32>
    %29 = arith.addf %26, %28 : vector<8x1xf32>
    %30 = tpu.transpose %29, [1, 0] : vector<8x1xf32> -> vector<1x8xf32>
    %31 = vector.shape_cast %30 : vector<1x8xf32> to vector<1x1x8xf32>
    %c0_23 = arith.constant 0 : index
    %c0_24 = arith.constant 0 : index
    %c0_25 = arith.constant 0 : index
    %32 = vector.load %arg10[%c0_23, %c0_24, %c0_25] : memref<1x1x8xf32, #tpu.memory_space<vmem>>, vector<1x1x8xf32>
    tpu.vector_store %arg10[%c0_23, %c0_24, %c0_25], %31 {strides = array<i32>} : memref<1x1x8xf32, #tpu.memory_space<vmem>>, vector<1x1x8xf32>,
    return
  }
  func.func @transform_0(%arg0: i32) -> (i32, i32) {
    %c0_i32 = arith.constant 0 : i32
    %c0_i32_0 = arith.constant 0 : i32
    return %arg0, %c0_i32 : i32, i32
  }
  func.func @transform_1(%arg0: i32) -> (i32, i32) {
    %c0_i32 = arith.constant 0 : i32
    %c0_i32_0 = arith.constant 0 : i32
    %c0_i32_1 = arith.constant 0 : i32
    return %c0_i32, %c0_i32_0 : i32, i32
  }
  func.func @transform_2(%arg0: i32) -> (i32, i32) {
    %c0_i32 = arith.constant 0 : i32
    %c0_i32_0 = arith.constant 0 : i32
    %c0_i32_1 = arith.constant 0 : i32
    return %c0_i32, %c0_i32_0 : i32, i32
  }
  func.func @transform_3(%arg0: i32) -> (i32, i32) {
    %c0_i32 = arith.constant 0 : i32
    %c0_i32_0 = arith.constant 0 : i32
    %c0_i32_1 = arith.constant 0 : i32
    return %c0_i32, %c0_i32_0 : i32, i32
  }
  func.func @transform_4(%arg0: i32) -> (i32, i32) {
    %c0_i32 = arith.constant 0 : i32
    %c0_i32_0 = arith.constant 0 : i32
    %c0_i32_1 = arith.constant 0 : i32
    return %c0_i32, %c0_i32_0 : i32, i32
  }
  func.func @transform_5(%arg0: i32) -> (i32, i32) {
    %c0_i32 = arith.constant 0 : i32
    %c0_i32_0 = arith.constant 0 : i32
    %c0_i32_1 = arith.constant 0 : i32
    return %c0_i32, %c0_i32_0 : i32, i32
  }
  func.func @transform_6(%arg0: i32) -> (i32, i32) {
    %c0_i32 = arith.constant 0 : i32
    %c0_i32_0 = arith.constant 0 : i32
    %c0_i32_1 = arith.constant 0 : i32
    return %c0_i32, %c0_i32_0 : i32, i32
  }
  func.func @transform_7(%arg0: i32) -> (i32, i32) {
    %c0_i32 = arith.constant 0 : i32
    %c0_i32_0 = arith.constant 0 : i32
    %c0_i32_1 = arith.constant 0 : i32
    return %c0_i32, %c0_i32_0 : i32, i32
  }
  func.func @transform_8(%arg0: i32) -> (i32, i32) {
    %c0_i32 = arith.constant 0 : i32
    %c0_i32_0 = arith.constant 0 : i32
    %c0_i32_1 = arith.constant 0 : i32
    return %c0_i32, %c0_i32_0 : i32, i32
  }
  func.func @transform_9(%arg0: i32) -> (i32, i32, i32) {
    %c0_i32 = arith.constant 0 : i32
    %c0_i32_0 = arith.constant 0 : i32
    %c0_i32_1 = arith.constant 0 : i32
    return %arg0, %c0_i32, %c0_i32_0 : i32, i32, i32
  }
}

</mosaic_0001>

<llo_original>
// kernel: tpu_custom_call.1
$region0: #{tpu_custom_call.1}
  #allocation0 [shape = 'u32[]', space=smem, size = 0x4, offset = 0x4, fixed_abs, tag = 'smem constant byte address 0x4 - core index']
  #allocation1 [shape = 'u32[144,128]{1,0:T(1,128)}', space=vmem, size = 0x12000, scoped, tag = 'internal scratch']
  #allocation2 [shape = 'f32[1,1]{1,0:T(1,128)S(1)}', space=vmem, size = 0x200, scoped, tag = 'scoped memory for tpu_custom_call.1']
  %s0 = inlined_call_operand.hbm [shape: f32[8,32], index: 0, kind: input, shape index: {}]
  %s1 = inlined_call_operand.hbm [shape: f32[32,128], index: 1, kind: input, shape index: {}]
  %s2 = inlined_call_operand.vmem [shape: f32[1,128], index: 2, kind: input, shape index: {}]
  %s3 = inlined_call_operand.hbm [shape: f32[128,256], index: 3, kind: input, shape index: {}]
  %s4 = inlined_call_operand.vmem [shape: f32[1,256], index: 4, kind: input, shape index: {}]
  %s5 = inlined_call_operand.hbm [shape: f32[256,128], index: 5, kind: input, shape index: {}]
  %s6 = inlined_call_operand.vmem [shape: f32[1,128], index: 6, kind: input, shape index: {}]
  %s7 = inlined_call_operand.vmem [shape: f32[1,128], index: 7, kind: input, shape index: {}]
  %s8 = inlined_call_operand.<no memory space> [shape: f32[1,1], index: 8, kind: input, shape index: {}]
  %s9 = inlined_call_operand.hbm [shape: f32[1,1,8], index: 9, kind: output, shape index: {}]
  %s10 = sld [smem:[#allocation0]]
  $region62: #{tpu_custom_call.1} parent=0
    _
  %s12 = ssub.s32 1, %s10
  %s13 = scalar_select 0, %s12, %s10
  %v14 = vstv %s8
  %15 = vst [vmem:[#allocation2] sm:$0x1] %v14
  $region1: #{tpu_custom_call.1} parent=0
    #allocation3 [shape = 'u8[4096]{0}', space=vmem, size = 0x1000, scoped, tag = 'input window, operand 0, single buffered']
    #allocation4 [shape = 's32[1]{0}', space=sflag, size = 0x4, scoped, tag = 'scoped memory for tpu_custom_call.1']
    #allocation5 [shape = 's32[1]{0}', space=sflag, size = 0x4, scoped, tag = 'scoped memory for tpu_custom_call.1']
    #allocation6 [shape = 'u8[16384]{0}', space=vmem, size = 0x4000, scoped, tag = 'input window, operand 1, single buffered']
    #allocation7 [shape = 's32[1]{0}', space=sflag, size = 0x4, scoped, tag = 'scoped memory for tpu_custom_call.1']
    #allocation8 [shape = 'u8[131072]{0}', space=vmem, size = 0x20000, scoped, tag = 'input window, operand 3, single buffered']
    #allocation9 [shape = 'u8[131072]{0}', space=vmem, size = 0x20000, scoped, tag = 'input window, operand 5, single buffered']
    #allocation10 [shape = 's32[1]{0}', space=sflag, size = 0x4, scoped, tag = 'scoped memory for tpu_custom_call.1']
    #allocation11 [shape = 'u8[512]{0}', space=vmem, size = 0x400, scoped, tag = 'output window, operand 0, single buffered']
    %16 = vsyncpa [#allocation4], 0
    %17 = vsyncpa [#allocation7], 0
    %18 = vsyncpa [#allocation10], 0
    %19 = vsyncpa [#allocation5], 0
    // Predicated region
    $region2: #{tpu_custom_call.1} parent=1 // pred_check
      _
    $region3: #{tpu_custom_call.1} parent=1 // pred_check_branch
      %21 = sbr.rel (0) target = $region5
    $region4: #{tpu_custom_call.1} parent=1 // pred_region
      %s23 = ssub.s32 128, 128
      %24 = vsyncadd [#allocation4], %s23
      %s26 = sshll.u32 [#allocation3], 4
      %s27 = int_to_ptr.vmem [resolvable:$true] %s26
      %29 = dma.hbm_to_vmem [thread:$0]  %s0, 128, %s27, [#allocation4]
    $region5: #{tpu_custom_call.1} parent=1 // pred_fallthru
      _
    // Predicated region
    $region6: #{tpu_custom_call.1} parent=1 // pred_check
      _
    $region7: #{tpu_custom_call.1} parent=1 // pred_check_branch
      %31 = sbr.rel (0) target = $region9
    $region8: #{tpu_custom_call.1} parent=1 // pred_region
      %s33 = ssub.s32 512, 512
      %34 = vsyncadd [#allocation7], %s33
      %s35 = sshll.u32 [#allocation6], 4
      %s36 = int_to_ptr.vmem [resolvable:$true] %s35
      %41 = dma.hbm_to_vmem [thread:$0]  %s1, 512, %s36, [#allocation7], 128, 128, 8
    $region9: #{tpu_custom_call.1} parent=1 // pred_fallthru
      _
    // Predicated region
    $region10: #{tpu_custom_call.1} parent=1 // pred_check
      _
    $region11: #{tpu_custom_call.1} parent=1 // pred_check_branch
      %43 = sbr.rel (0) target = $region13
    $region12: #{tpu_custom_call.1} parent=1 // pred_region
      _
    $region13: #{tpu_custom_call.1} parent=1 // pred_fallthru
      _
    // Predicated region
    $region14: #{tpu_custom_call.1} parent=1 // pred_check
      _
    $region15: #{tpu_custom_call.1} parent=1 // pred_check_branch
      %45 = sbr.rel (0) target = $region17
    $region16: #{tpu_custom_call.1} parent=1 // pred_region
      %s47 = ssub.s32 4096, 4096
      %48 = vsyncadd [#allocation7], %s47
      %s49 = sshll.u32 [#allocation8], 4
      %s50 = int_to_ptr.vmem [resolvable:$true] %s49
      %55 = dma.hbm_to_vmem [thread:$0]  %s3, 4096, %s50, [#allocation7], 256, 256, 16
    $region17: #{tpu_custom_call.1} parent=1 // pred_fallthru
      _
    // Predicated region
    $region18: #{tpu_custom_call.1} parent=1 // pred_check
      _
    $region19: #{tpu_custom_call.1} parent=1 // pred_check_branch
      %57 = sbr.rel (0) target = $region21
    $region20: #{tpu_custom_call.1} parent=1 // pred_region
      _
    $region21: #{tpu_custom_call.1} parent=1 // pred_fallthru
      _
    // Predicated region
    $region22: #{tpu_custom_call.1} parent=1 // pred_check
      _
    $region23: #{tpu_custom_call.1} parent=1 // pred_check_branch
      %59 = sbr.rel (0) target = $region25
    $region24: #{tpu_custom_call.1} parent=1 // pred_region
      %s61 = ssub.s32 4096, 4096
      %62 = vsyncadd [#allocation10], %s61
      %s63 = sshll.u32 [#allocation9], 4
      %s64 = int_to_ptr.vmem [resolvable:$true] %s63
      %69 = dma.hbm_to_vmem [thread:$0]  %s5, 4096, %s64, [#allocation10], 128, 128, 8
    $region25: #{tpu_custom_call.1} parent=1 // pred_fallthru
      _
    // Predicated region
    $region26: #{tpu_custom_call.1} parent=1 // pred_check
      _
    $region27: #{tpu_custom_call.1} parent=1 // pred_check_branch
      %71 = sbr.rel (0) target = $region29
    $region28: #{tpu_custom_call.1} parent=1 // pred_region
      _
    $region29: #{tpu_custom_call.1} parent=1 // pred_fallthru
      _
    // Predicated region
    $region30: #{tpu_custom_call.1} parent=1 // pred_check
      _
    $region31: #{tpu_custom_call.1} parent=1 // pred_check_branch
      %73 = sbr.rel (0) target = $region33
    $region32: #{tpu_custom_call.1} parent=1 // pred_region
      _
    $region33: #{tpu_custom_call.1} parent=1 // pred_fallthru
      _
    // Predicated region
    $region34: #{tpu_custom_call.1} parent=1 // pred_check
      _
    $region35: #{tpu_custom_call.1} parent=1 // pred_check_branch
      %75 = sbr.rel (0) target = $region37
    $region36: #{tpu_custom_call.1} parent=1 // pred_region
      _
    $region37: #{tpu_custom_call.1} parent=1 // pred_fallthru
      _
    // Predicated region
    $region38: #{tpu_custom_call.1} parent=1 // pred_check
      _
    $region39: #{tpu_custom_call.1} parent=1 // pred_check_branch
      %77 = sbr.rel (0) target = $region41
    $region40: #{tpu_custom_call.1} parent=1 // pred_region
      %78 = dma.done [#allocation4], 128
    $region41: #{tpu_custom_call.1} parent=1 // pred_fallthru
      _
    // Predicated region
    $region42: #{tpu_custom_call.1} parent=1 // pred_check
      _
    $region43: #{tpu_custom_call.1} parent=1 // pred_check_branch
      %80 = sbr.rel (0) target = $region45
    $region44: #{tpu_custom_call.1} parent=1 // pred_region
      %81 = dma.done [#allocation7], 512
    $region45: #{tpu_custom_call.1} parent=1 // pred_fallthru
      _
    // Predicated region
    $region46: #{tpu_custom_call.1} parent=1 // pred_check
      _
    $region47: #{tpu_custom_call.1} parent=1 // pred_check_branch
      %83 = sbr.rel (0) target = $region49
    $region48: #{tpu_custom_call.1} parent=1 // pred_region
      %84 = dma.done [#allocation7], 4096
    $region49: #{tpu_custom_call.1} parent=1 // pred_fallthru
      _
    // Predicated region
    $region50: #{tpu_custom_call.1} parent=1 // pred_check
      _
    $region51: #{tpu_custom_call.1} parent=1 // pred_check_branch
      %86 = sbr.rel (0) target = $region53
    $region52: #{tpu_custom_call.1} parent=1 // pred_region
      %87 = dma.done [#allocation10], 4096
    $region53: #{tpu_custom_call.1} parent=1 // pred_fallthru
      _
    %v88 = vld [vmem:[#allocation3] sm:$0xff]
    %v89 = vld [vmem:[#allocation6] sm:$0xff]
    %v90 = vld [vmem:[#allocation6 + $0x8] sm:$0xff]
    %v91 = vld [vmem:[#allocation6 + $0x10] sm:$0xff]
    %v92 = vld [vmem:[#allocation6 + $0x18] sm:$0xff]
    %v93 = vld [vmem:[%s2] sm:$0x1]
    %v95 = vlaneseq
    %v96 = vshrl.u32 %v95, 7
    %v97 = vsub.s32 0, %v96
    %v98 = vrot.slane %v93, %v97
    %vm100 = vcmask 261120
    %v102 = vsel %vm100, %v88, 0
    %104 = vmatprep.subr.mxu0 0.0
    %105 = vmatpush1.msra.mxu0 0.0
    %106 = vmatprep.subr.mxu0 0.0
    %107 = vmatpush1.msra.mxu0 0.0
    %108 = vmatprep.subr.mxu0 0.0
    %109 = vmatpush1.msra.mxu0 0.0
    %110 = vmatprep.subr.mxu0 0.0
    %111 = vmatpush1.msra.mxu0 0.0
    %112 = vmatprep.subr.mxu0 0.0
    %113 = vmatpush1.msra.mxu0 0.0
    %114 = vmatprep.subr.mxu0 0.0
    %115 = vmatpush1.msra.mxu0 0.0
    %116 = vmatprep.subr.mxu0 0.0
    %117 = vmatpush1.msra.mxu0 0.0
    %118 = vmatprep.subr.mxu0 0.0
    %119 = vmatpush1.msra.mxu0 0.0
    %120 = vmatprep.subr.mxu0 0.0
    %121 = vmatpush1.msra.mxu0 0.0
    %122 = vmatprep.subr.mxu0 0.0
    %123 = vmatpush1.msra.mxu0 0.0
    %124 = vmatprep.subr.mxu0 0.0
    %125 = vmatpush1.msra.mxu0 0.0
    %126 = vmatprep.subr.mxu0 0.0
    %127 = vmatpush1.msra.mxu0 0.0
    %128 = vmatprep.subr.mxu0 0.0
    %129 = vmatpush1.msra.mxu0 %v92
    %130 = vmatprep.subr.mxu0 0.0
    %131 = vmatpush1.msra.mxu0 %v91
    %132 = vmatprep.subr.mxu0 0.0
    %133 = vmatpush1.msra.mxu0 %v90
    %134 = vmatprep.subr.mxu0 0.0
    %135 = vmatpush1.msra.mxu0 %v89
    %136 = vmatprep.subr.mxu0 0.0
    %137 = vmatpush2.msra.mxu0 0.0
    %138 = vmatprep.subr.mxu0 0.0
    %139 = vmatpush2.msra.mxu0 0.0
    %140 = vmatprep.subr.mxu0 0.0
    %141 = vmatpush2.msra.mxu0 0.0
    %142 = vmatprep.subr.mxu0 0.0
    %143 = vmatpush2.msra.mxu0 0.0
    %144 = vmatprep.subr.mxu0 0.0
    %145 = vmatpush2.msra.mxu0 0.0
    %146 = vmatprep.subr.mxu0 0.0
    %147 = vmatpush2.msra.mxu0 0.0
    %148 = vmatprep.subr.mxu0 0.0
    %149 = vmatpush2.msra.mxu0 0.0
    %150 = vmatprep.subr.mxu0 0.0
    %151 = vmatpush2.msra.mxu0 0.0
    %152 = vmatprep.subr.mxu0 0.0
    %153 = vmatpush2.msra.mxu0 0.0
    %154 = vmatprep.subr.mxu0 0.0
    %155 = vmatpush2.msra.mxu0 0.0
    %156 = vmatprep.subr.mxu0 0.0
    %157 = vmatpush2.msra.mxu0 0.0
    %158 = vmatprep.subr.mxu0 0.0
    %159 = vmatpush2.msra.mxu0 0.0
    %160 = vmatprep.subr.mxu0 0.0
    %161 = vmatpush2.msra.mxu0 0.0
    %162 = vmatprep.subr.mxu0 0.0
    %163 = vmatpush2.msra.mxu0 0.0
    %164 = vmatprep.subr.mxu0 0.0
    %165 = vmatpush2.msra.mxu0 0.0
    %166 = vmatprep.subr.mxu0 0.0
    %167 = vmatpush2.msra.mxu0 0.0
    %168 = vmatprep.mubr.f32.mxu0 0.0
    %169 = vmatmul.mubr.f32.gmra.mxu0 %v102
    %v170 = vpop.f32.mrf.mxu0
    %v171 = vadd.f32 %v98, %v170
    %v172 = vpop.f32.mrf.mxu0
    %173 = vdwg.mxu0
    %v174 = vmax.f32 %v171, 0.0
    %v175 = vld [vmem:[#allocation8] sm:$0xff]
    %v176 = vld [vmem:[#allocation8 + $0x8] sm:$0xff]
    %v177 = vld [vmem:[#allocation8 + $0x10] sm:$0xff]
    %v178 = vld [vmem:[#allocation8 + $0x18] sm:$0xff]
    %v179 = vld [vmem:[#allocation8 + $0x20] sm:$0xff]
    %v180 = vld [vmem:[#allocation8 + $0x28] sm:$0xff]
    %v181 = vld [vmem:[#allocation8 + $0x30] sm:$0xff]
    %v182 = vld [vmem:[#allocation8 + $0x38] sm:$0xff]
    %v183 = vld [vmem:[#allocation8 + $0x40] sm:$0xff]
    %v184 = vld [vmem:[#allocation8 + $0x48] sm:$0xff]
    %v185 = vld [vmem:[#allocation8 + $0x50] sm:$0xff]
    %v186 = vld [vmem:[#allocation8 + $0x58] sm:$0xff]
    %v187 = vld [vmem:[#allocation8 + $0x60] sm:$0xff]
    %v188 = vld [vmem:[#allocation8 + $0x68] sm:$0xff]
    %v189 = vld [vmem:[#allocation8 + $0x70] sm:$0xff]
    %v190 = vld [vmem:[#allocation8 + $0x78] sm:$0xff]
    %v191 = vld [vmem:[#allocation8 + $0x80] sm:$0xff]
    %v192 = vld [vmem:[#allocation8 + $0x88] sm:$0xff]
    %v193 = vld [vmem:[#allocation8 + $0x90] sm:$0xff]
    %v194 = vld [vmem:[#allocation8 + $0x98] sm:$0xff]
    %v195 = vld [vmem:[#allocation8 + $0xa0] sm:$0xff]
    %v196 = vld [vmem:[#allocation8 + $0xa8] sm:$0xff]
    %v197 = vld [vmem:[#allocation8 + $0xb0] sm:$0xff]
    %v198 = vld [vmem:[#allocation8 + $0xb8] sm:$0xff]
    %v199 = vld [vmem:[#allocation8 + $0xc0] sm:$0xff]
    %v200 = vld [vmem:[#allocation8 + $0xc8] sm:$0xff]
    %v201 = vld [vmem:[#allocation8 + $0xd0] sm:$0xff]
    %v202 = vld [vmem:[#allocation8 + $0xd8] sm:$0xff]
    %v203 = vld [vmem:[#allocation8 + $0xe0] sm:$0xff]
    %v204 = vld [vmem:[#allocation8 + $0xe8] sm:$0xff]
    %v205 = vld [vmem:[#allocation8 + $0xf0] sm:$0xff]
    %v206 = vld [vmem:[#allocation8 + $0xf8] sm:$0xff]
    %v207 = vld [vmem:[%s4] sm:$0x3]
    %v209 = vlaneseq
    %v210 = vshrl.u32 %v209, 7
    %v211 = vsub.s32 0, %v210
    %v212 = vrot.slane %v207, %v211
    %v213 = vlaneseq
    %v214 = vshrl.u32 %v213, 7
    %v215 = vsub.s32 1, %v214
    %v216 = vrot.slane %v207, %v215
    %219 = vmatprep.subr.mxu0 %v206
    %220 = vmatpush1.msra.mxu0 %v205
    %221 = vmatprep.subr.mxu0 %v204
    %222 = vmatpush1.msra.mxu0 %v203
    %223 = vmatprep.subr.mxu0 %v202
    %224 = vmatpush1.msra.mxu0 %v201
    %225 = vmatprep.subr.mxu0 %v200
    %226 = vmatpush1.msra.mxu0 %v199
    %227 = vmatprep.subr.mxu0 %v198
    %228 = vmatpush1.msra.mxu0 %v197
    %229 = vmatprep.subr.mxu0 %v196
    %230 = vmatpush1.msra.mxu0 %v195
    %231 = vmatprep.subr.mxu0 %v194
    %232 = vmatpush1.msra.mxu0 %v193
    %233 = vmatprep.subr.mxu0 %v192
    %234 = vmatpush1.msra.mxu0 %v191
    %235 = vmatprep.subr.mxu0 %v190
    %236 = vmatpush1.msra.mxu0 %v189
    %237 = vmatprep.subr.mxu0 %v188
    %238 = vmatpush1.msra.mxu0 %v187
    %239 = vmatprep.subr.mxu0 %v186
    %240 = vmatpush1.msra.mxu0 %v185
    %241 = vmatprep.subr.mxu0 %v184
    %242 = vmatpush1.msra.mxu0 %v183
    %243 = vmatprep.subr.mxu0 %v182
    %244 = vmatpush1.msra.mxu0 %v181
    %245 = vmatprep.subr.mxu0 %v180
    %246 = vmatpush1.msra.mxu0 %v179
    %247 = vmatprep.subr.mxu0 %v178
    %248 = vmatpush1.msra.mxu0 %v177
    %249 = vmatprep.subr.mxu0 %v176
    %250 = vmatpush1.msra.mxu0 %v175
    %251 = vmatprep.subr.mxu0 0.0
    %252 = vmatpush2.msra.mxu0 0.0
    %253 = vmatprep.subr.mxu0 0.0
    %254 = vmatpush2.msra.mxu0 0.0
    %255 = vmatprep.subr.mxu0 0.0
    %256 = vmatpush2.msra.mxu0 0.0
    %257 = vmatprep.subr.mxu0 0.0
    %258 = vmatpush2.msra.mxu0 0.0
    %259 = vmatprep.subr.mxu0 0.0
    %260 = vmatpush2.msra.mxu0 0.0
    %261 = vmatprep.subr.mxu0 0.0
    %262 = vmatpush2.msra.mxu0 0.0
    %263 = vmatprep.subr.mxu0 0.0
    %264 = vmatpush2.msra.mxu0 0.0
    %265 = vmatprep.subr.mxu0 0.0
    %266 = vmatpush2.msra.mxu0 0.0
    %267 = vmatprep.subr.mxu0 0.0
    %268 = vmatpush2.msra.mxu0 0.0
    %269 = vmatprep.subr.mxu0 0.0
    %270 = vmatpush2.msra.mxu0 0.0
    %271 = vmatprep.subr.mxu0 0.0
    %272 = vmatpush2.msra.mxu0 0.0
    %273 = vmatprep.subr.mxu0 0.0
    %274 = vmatpush2.msra.mxu0 0.0
    %275 = vmatprep.subr.mxu0 0.0
    %276 = vmatpush2.msra.mxu0 0.0
    %277 = vmatprep.subr.mxu0 0.0
    %278 = vmatpush2.msra.mxu0 0.0
    %279 = vmatprep.subr.mxu0 0.0
    %280 = vmatpush2.msra.mxu0 0.0
    %281 = vmatprep.subr.mxu0 0.0
    %282 = vmatpush2.msra.mxu0 0.0
    %283 = vmatprep.mubr.f32.mxu0 0.0
    %284 = vmatmul.mubr.f32.gmra.mxu0 %v174
    %v285 = vpop.f32.mrf.mxu0
    %v286 = vadd.f32 %v212, %v285
    %v287 = vpop.f32.mrf.mxu0
    %v288 = vadd.f32 %v216, %v287
    %289 = vdwg.mxu0
    %v290 = vmax.f32 %v286, 0.0
    %v291 = vmax.f32 %v288, 0.0
    %v292 = vld [vmem:[#allocation9] sm:$0xff]
    %v293 = vld [vmem:[#allocation9 + $0x8] sm:$0xff]
    %v294 = vld [vmem:[#allocation9 + $0x10] sm:$0xff]
    %v295 = vld [vmem:[#allocation9 + $0x18] sm:$0xff]
    %v296 = vld [vmem:[#allocation9 + $0x20] sm:$0xff]
    %v297 = vld [vmem:[#allocation9 + $0x28] sm:$0xff]
    %v298 = vld [vmem:[#allocation9 + $0x30] sm:$0xff]
    %v299 = vld [vmem:[#allocation9 + $0x38] sm:$0xff]
    %v300 = vld [vmem:[#allocation9 + $0x40] sm:$0xff]
    %v301 = vld [vmem:[#allocation9 + $0x48] sm:$0xff]
    %v302 = vld [vmem:[#allocation9 + $0x50] sm:$0xff]
    %v303 = vld [vmem:[#allocation9 + $0x58] sm:$0xff]
    %v304 = vld [vmem:[#allocation9 + $0x60] sm:$0xff]
    %v305 = vld [vmem:[#allocation9 + $0x68] sm:$0xff]
    %v306 = vld [vmem:[#allocation9 + $0x70] sm:$0xff]
    %v307 = vld [vmem:[#allocation9 + $0x78] sm:$0xff]
    %v308 = vld [vmem:[#allocation9 + $0x80] sm:$0xff]
    %v309 = vld [vmem:[#allocation9 + $0x88] sm:$0xff]
    %v310 = vld [vmem:[#allocation9 + $0x90] sm:$0xff]
    %v311 = vld [vmem:[#allocation9 + $0x98] sm:$0xff]
    %v312 = vld [vmem:[#allocation9 + $0xa0] sm:$0xff]
    %v313 = vld [vmem:[#allocation9 + $0xa8] sm:$0xff]
    %v314 = vld [vmem:[#allocation9 + $0xb0] sm:$0xff]
    %v315 = vld [vmem:[#allocation9 + $0xb8] sm:$0xff]
    %v316 = vld [vmem:[#allocation9 + $0xc0] sm:$0xff]
    %v317 = vld [vmem:[#allocation9 + $0xc8] sm:$0xff]
    %v318 = vld [vmem:[#allocation9 + $0xd0] sm:$0xff]
    %v319 = vld [vmem:[#allocation9 + $0xd8] sm:$0xff]
    %v320 = vld [vmem:[#allocation9 + $0xe0] sm:$0xff]
    %v321 = vld [vmem:[#allocation9 + $0xe8] sm:$0xff]
    %v322 = vld [vmem:[#allocation9 + $0xf0] sm:$0xff]
    %v323 = vld [vmem:[#allocation9 + $0xf8] sm:$0xff]
    %v324 = vld [vmem:[%s6] sm:$0x1]
    %v326 = vlaneseq
    %v327 = vshrl.u32 %v326, 7
    %v328 = vsub.s32 0, %v327
    %v329 = vrot.slane %v324, %v328
    %331 = vmatprep.subr.mxu0 0.0
    %332 = vmatpush1.msra.mxu0 %v307
    %333 = vmatprep.subr.mxu0 0.0
    %334 = vmatpush1.msra.mxu0 %v306
    %335 = vmatprep.subr.mxu0 0.0
    %336 = vmatpush1.msra.mxu0 %v305
    %337 = vmatprep.subr.mxu0 0.0
    %338 = vmatpush1.msra.mxu0 %v304
    %339 = vmatprep.subr.mxu0 0.0
    %340 = vmatpush1.msra.mxu0 %v303
    %341 = vmatprep.subr.mxu0 0.0
    %342 = vmatpush1.msra.mxu0 %v302
    %343 = vmatprep.subr.mxu0 0.0
    %344 = vmatpush1.msra.mxu0 %v301
    %345 = vmatprep.subr.mxu0 0.0
    %346 = vmatpush1.msra.mxu0 %v300
    %347 = vmatprep.subr.mxu0 0.0
    %348 = vmatpush1.msra.mxu0 %v299
    %349 = vmatprep.subr.mxu0 0.0
    %350 = vmatpush1.msra.mxu0 %v298
    %351 = vmatprep.subr.mxu0 0.0
    %352 = vmatpush1.msra.mxu0 %v297
    %353 = vmatprep.subr.mxu0 0.0
    %354 = vmatpush1.msra.mxu0 %v296
    %355 = vmatprep.subr.mxu0 0.0
    %356 = vmatpush1.msra.mxu0 %v295
    %357 = vmatprep.subr.mxu0 0.0
    %358 = vmatpush1.msra.mxu0 %v294
    %359 = vmatprep.subr.mxu0 0.0
    %360 = vmatpush1.msra.mxu0 %v293
    %361 = vmatprep.subr.mxu0 0.0
    %362 = vmatpush1.msra.mxu0 %v292
    %363 = vmatprep.subr.mxu0 0.0
    %364 = vmatpush2.msra.mxu0 %v323
    %365 = vmatprep.subr.mxu0 0.0
    %366 = vmatpush2.msra.mxu0 %v322
    %367 = vmatprep.subr.mxu0 0.0
    %368 = vmatpush2.msra.mxu0 %v321
    %369 = vmatprep.subr.mxu0 0.0
    %370 = vmatpush2.msra.mxu0 %v320
    %371 = vmatprep.subr.mxu0 0.0
    %372 = vmatpush2.msra.mxu0 %v319
    %373 = vmatprep.subr.mxu0 0.0
    %374 = vmatpush2.msra.mxu0 %v318
    %375 = vmatprep.subr.mxu0 0.0
    %376 = vmatpush2.msra.mxu0 %v317
    %377 = vmatprep.subr.mxu0 0.0
    %378 = vmatpush2.msra.mxu0 %v316
    %379 = vmatprep.subr.mxu0 0.0
    %380 = vmatpush2.msra.mxu0 %v315
    %381 = vmatprep.subr.mxu0 0.0
    %382 = vmatpush2.msra.mxu0 %v314
    %383 = vmatprep.subr.mxu0 0.0
    %384 = vmatpush2.msra.mxu0 %v313
    %385 = vmatprep.subr.mxu0 0.0
    %386 = vmatpush2.msra.mxu0 %v312
    %387 = vmatprep.subr.mxu0 0.0
    %388 = vmatpush2.msra.mxu0 %v311
    %389 = vmatprep.subr.mxu0 0.0
    %390 = vmatpush2.msra.mxu0 %v310
    %391 = vmatprep.subr.mxu0 0.0
    %392 = vmatpush2.msra.mxu0 %v309
    %393 = vmatprep.subr.mxu0 0.0
    %394 = vmatpush2.msra.mxu0 %v308
    %395 = vmatprep.mubr.f32.mxu0 %v291
    %396 = vmatmul.mubr.f32.gmra.mxu0 %v290
    %v397 = vpop.f32.mrf.mxu0
    %v398 = vadd.f32 %v329, %v397
    %v399 = vpop.f32.mrf.mxu0
    %400 = vdwg.mxu0
    %v401 = vmax.f32 %v398, 0.0
    %v402 = vld [vmem:[%s7] sm:$0x1]
    %v404 = vlaneseq
    %v405 = vshrl.u32 %v404, 7
    %v406 = vsub.s32 0, %v405
    %v407 = vrot.slane %v402, %v406
    %v409 = vmul.f32 %v401, %v407
    %410 = vadd.xlane.f32.xlu0 %v409
    %v411 = vpop.xlane.xlu0 %410
    %v412 = vld [vmem:[#allocation2] sm:$0x1]
    %v414 = vlaneseq
    %v415 = vshrl.u32 %v414, 7
    %v416 = vsub.s32 0, %v415
    %v417 = vrot.slane %v412, %v416
    %v419 = vadd.f32 %v411, %v417
    %420 = vxpose.xlu0.b32.start [1/16] %v419, 128
    %421 = vxpose.xlu0.b32.cont [2/16] 0.0, 128
    %422 = vxpose.xlu0.b32.cont [3/16] 0.0, 128
    %423 = vxpose.xlu0.b32.cont [4/16] 0.0, 128
    %424 = vxpose.xlu0.b32.cont [5/16] 0.0, 128
    %425 = vxpose.xlu0.b32.cont [6/16] 0.0, 128
    %426 = vxpose.xlu0.b32.cont [7/16] 0.0, 128
    %427 = vxpose.xlu0.b32.cont [8/16] 0.0, 128
    %428 = vxpose.xlu0.b32.cont [9/16] 0.0, 128
    %429 = vxpose.xlu0.b32.cont [10/16] 0.0, 128
    %430 = vxpose.xlu0.b32.cont [11/16] 0.0, 128
    %431 = vxpose.xlu0.b32.cont [12/16] 0.0, 128
    %432 = vxpose.xlu0.b32.cont [13/16] 0.0, 128
    %433 = vxpose.xlu0.b32.cont [14/16] 0.0, 128
    %434 = vxpose.xlu0.b32.cont [15/16] 0.0, 128
    %435 = vxpose.xlu0.b32.end [16/16] 0.0, 128
    %v436 = vpop.trf.xlu0
    %v437 = vpop.trf.xlu0
    %v438 = vpop.trf.xlu0
    %v439 = vpop.trf.xlu0
    %v440 = vpop.trf.xlu0
    %v441 = vpop.trf.xlu0
    %v442 = vpop.trf.xlu0
    %v443 = vpop.trf.xlu0
    %v444 = vpop.trf.xlu0
    %v445 = vpop.trf.xlu0
    %v446 = vpop.trf.xlu0
    %v447 = vpop.trf.xlu0
    %v448 = vpop.trf.xlu0
    %v449 = vpop.trf.xlu0
    %v450 = vpop.trf.xlu0
    %v451 = vpop.trf.xlu0
    %vm452 = vcmask 57344
    %453 = vst.msk [vmem:[#allocation11] sm:$0x1] %vm452, %v436
    // Predicated region
    $region54: #{tpu_custom_call.1} parent=1 // pred_check
      _
    $region55: #{tpu_custom_call.1} parent=1 // pred_check_branch
      %455 = sbr.rel (0) target = $region57
    $region56: #{tpu_custom_call.1} parent=1 // pred_region
      %s457 = ssub.s32 16, 16
      %458 = vsyncadd [#allocation5], %s457
      %s460 = sshll.u32 [#allocation11], 4
      %s461 = int_to_ptr.vmem [resolvable:$true] %s460
      %463 = dma.vmem_to_hbm [thread:$0]  %s461, 16, %s9, [#allocation5]
    $region57: #{tpu_custom_call.1} parent=1 // pred_fallthru
      _
    // Predicated region
    $region58: #{tpu_custom_call.1} parent=1 // pred_check
      _
    $region59: #{tpu_custom_call.1} parent=1 // pred_check_branch
      %465 = sbr.rel (0) target = $region61
    $region60: #{tpu_custom_call.1} parent=1 // pred_region
      %466 = dma.done [#allocation5], 16
    $region61: #{tpu_custom_call.1} parent=1 // pred_fallthru
      _
    %467 = vsyncpa [#allocation4], 1
    %468 = vsyncpa [#allocation7], 1
    %469 = vsyncpa [#allocation10], 1
    %470 = vsyncpa [#allocation5], 1

</llo_original>
